<compile_context>
chip_gen: v6e
topology: v6e:2x2x1
jax: 0.10.0
libtpu: 0.0.40
codegen_flags: <defaults>
</compile_context>

<pallas_src>
import math
from collections import namedtuple
from functools import partial

import numpy as np
import jax
import jax.numpy as jnp
from jax.experimental import pallas as pl
from jax.experimental.pallas import tpu as pltpu

SphericalPointCloud = namedtuple("SphericalPointCloud", ["xyz", "feats", "anchors"])


def _round_up(x, m):
    return -(-x // m) * m


# ----------------------------------------------------------------------------
# Pallas kernel: fused (folded conv matmul) + BN-shift + ReLU, bf16 in / bf16 out
# ----------------------------------------------------------------------------
def _fused_intra_zpconv_kernel(x_ref, w_ref, shift_ref, o_ref):
    # x_ref:     (TILE_M, Kpad)    bf16   flattened (batch*point) tile
    # w_ref:     (Kpad, TILE_N)    bf16   effective weight panel (BN scale folded in)
    # shift_ref: (1, TILE_N)       f32    BN shift broadcast over anchors
    # o_ref:     (TILE_M, TILE_N)  bf16   lane-dense output tile
    y = jnp.dot(x_ref[...], w_ref[...], preferred_element_type=jnp.float32)  # MXU, f32 acc
    y = y + shift_ref[...]                                                    # BN(eval) shift
    o_ref[...] = jnp.maximum(y, 0.0).astype(o_ref.dtype)                      # ReLU, bf16 store


def _pallas_matmul_bn_relu(x2, w2, shift2, tile_m, tile_n, vmem_limit):
    """x2: [M_pad, Kpad] bf16; w2: [Kpad, Npad] bf16; shift2: [1, Npad] f32 -> bf16 [M_pad, Npad]."""
    M_pad, Kpad = x2.shape
    Kp2, Npad = w2.shape
    assert Kpad == Kp2 and M_pad % tile_m == 0 and Npad % tile_n == 0
    grid = (M_pad // tile_m, Npad // tile_n)
    n_tiles_m, n_tiles_n = grid

    # Weight / shift never change across the grid when n_tiles_n == 1 -> single-buffer them
    # (halves their VMEM footprint); when streamed in N-panels keep default double buffering.
    # TODO(synk): if xprof shows exposed input DMA, sweep pl.Buffered(3) on the x-tile spec.
    const_mode = pl.Buffered(1) if n_tiles_n == 1 else None

    flops = 2 * M_pad * Kpad * Npad
    bytes_accessed = (x2.size * 2 * n_tiles_n
                      + w2.size * 2 * (1 if n_tiles_n == 1 else n_tiles_m)
                      + shift2.size * 4
                      + M_pad * Npad * 2)  # bf16 output writeback

    return pl.pallas_call(
        _fused_intra_zpconv_kernel,
        out_shape=jax.ShapeDtypeStruct((M_pad, Npad), jnp.bfloat16),
        grid=grid,
        in_specs=[
            pl.BlockSpec((tile_m, Kpad), lambda i, j: (i, 0)),                 # point tile
            pl.BlockSpec((Kpad, tile_n), lambda i, j: (0, j),
                         pipeline_mode=const_mode),                           # weight panel
            pl.BlockSpec((1, tile_n), lambda i, j: (0, j),
                         pipeline_mode=const_mode),                           # BN shift
        ],
        out_specs=pl.BlockSpec((tile_m, tile_n), lambda i, j: (i, j)),
        compiler_params=pltpu.CompilerParams(
            dimension_semantics=("parallel", "parallel"),   # shards across TCs on v7x
            vmem_limit_bytes=vmem_limit),
        cost_estimate=pl.CostEstimate(
            flops=flops, transcendentals=0, bytes_accessed=bytes_accessed),
    )(x2, w2, shift2)


# ----------------------------------------------------------------------------
# Per-generation VMEM budget + tiling selection (host-side)
# ----------------------------------------------------------------------------
def _pick_vmem_limit():
    """Scoped-VMEM limit derived from the chip: ~half of physical VMEM.
    v5e/v6e (128 MiB) -> 64 MiB; v7x (64 MiB per TC) -> 32 MiB (stays under ~48 MiB)."""
    try:
        cap = int(pltpu.get_tpu_info().vmem_capacity_bytes)
    except Exception:
        cap = 64 * 1024 * 1024      # conservative fallback = v7x per-TC capacity
    return max(32 * 1024 * 1024, min(cap // 2, 100 * 1024 * 1024))


def _choose_tiling(M, Kpad, Npad, vmem_limit_bytes):
    """Pick (tile_m, tile_n) from the VMEM budget.

    Weight fully resident (single-buffered) when it comfortably fits; otherwise stream it in
    (Kpad, tile_n) column panels (double-buffered) — keeps the output lane-dense, needs no
    K accumulator, and only re-reads the (cheap) x tile N_tiles times."""
    budget = int(vmem_limit_bytes * 0.85)

    if Kpad * Npad * 2 <= budget // 3:
        tile_n = Npad
        w_foot = Kpad * Npad * 2                       # single-buffered resident weight
    else:
        tile_n = Npad - 128
        while tile_n > 128 and (Npad % tile_n != 0 or 2 * Kpad * tile_n * 2 > budget // 2):
            tile_n -= 128
        tile_n = max(tile_n, 128)
        w_foot = 2 * Kpad * tile_n * 2                 # double-buffered streamed panel

    # Point tile: biggest multiple of 16 (<= 2048) fitting double-buffered bf16 x + out tiles.
    per_row = 2 * Kpad * 2 + 2 * tile_n * 2
    tile_m = (max(budget - w_foot, 16 * per_row) // per_row) // 16 * 16
    tile_m = int(max(16, min(tile_m, 2048, _round_up(M, 16))))
    return tile_m, tile_n


# ----------------------------------------------------------------------------
# Parameter / geometry setup (plain numpy glue, host-side, once per param set)
# ----------------------------------------------------------------------------
def fibonacci_sphere(n):
    i = np.arange(n, dtype=np.float64)
    golden = math.pi * (3.0 - math.sqrt(5.0))
    y = 1.0 - 2.0 * (i + 0.5) / n
    r = np.sqrt(np.maximum(0.0, 1.0 - y * y))
    theta = golden * i
    pts = np.stack([np.cos(theta) * r, y, np.sin(theta) * r], axis=1)
    return pts.astype(np.float32)


def build_intra_kernel(anchors_in, anchors_out, kernel_size, aperture, sigma, anchor_nn):
    """Synthesized intra-anchor neighborhood kernel.

    intra_idx: [NA_out, ANN] indices of nearest input anchors
    intra_w:   [NA_out, ANN, KS] Gaussian ring weights of angular distance, aperture-masked
    """
    # TODO(synk): exact intra_idx/intra_w come from vgtk's precomputed anchor geometry
    # (get_intra_kernel); synthesized here deterministically with identical shapes/roles.
    cosang = np.clip(anchors_out @ anchors_in.T, -1.0, 1.0)
    ang = np.arccos(cosang)                                   # [NA_out, NA_in]
    idx = np.argsort(ang, axis=1)[:, :anchor_nn]              # [NA_out, ANN]
    nn_ang = np.take_along_axis(ang, idx, axis=1)             # [NA_out, ANN]
    centers = np.linspace(0.0, aperture, kernel_size)         # [KS]
    d = nn_ang[:, :, None] - centers[None, None, :]
    w = np.exp(-0.5 * (d / sigma) ** 2)
    w = w * (nn_ang[:, :, None] <= aperture)
    w = w / np.clip(w.sum(axis=1, keepdims=True), 1e-8, None)
    return idx.astype(np.int32), w.astype(np.float32)


def init_params(key, dim_in, dim_out, kernel_size):
    kW, kg, kb, km, kv = jax.random.split(key, 5)
    # BasicZPConv weight: xavier_normal_(gain=0.001) on shape [dim_out, dim_in*ks, 1, 1]
    fan_in = dim_in * kernel_size
    fan_out = dim_out
    std = 0.001 * math.sqrt(2.0 / (fan_in + fan_out))
    W = std * jax.random.normal(kW, (dim_out, dim_in * kernel_size), jnp.float32)
    # BatchNorm2d(dim_out) parameters (nonzero synthetic stats to exercise the BN math;
    # module is treated as eval-mode inference -> running stats, no dropout).
    gamma = 1.0 + 0.1 * jax.random.normal(kg, (dim_out,), jnp.float32)
    beta = 0.1 * jax.random.normal(kb, (dim_out,), jnp.float32)
    running_mean = 0.01 * jax.random.normal(km, (dim_out,), jnp.float32)
    running_var = jnp.abs(1.0 + 0.1 * jax.random.normal(kv, (dim_out,), jnp.float32))
    return W, gamma, beta, running_mean, running_var


def prepare_fused_params(intra_idx, intra_w, W, gamma, beta, running_mean, running_var,
                         dim_in, dim_out, kernel_size, na_in, eps=1e-5):
    """One-time fold (per parameter set) of the anchor-neighborhood kernel, the BasicZPConv
    weight and the BatchNorm(eval) scale into a lane-dense, 128-padded effective weight.
    Hoisted out of the per-call forward path (pure host-side numpy, exact)."""
    na_out, ann, ks = intra_w.shape
    assert ks == kernel_size
    K = dim_in * na_in
    n_out = na_out * dim_out

    # Dense anchor-mixing matrix M[a,k,n] = sum_j [idx[a,j]==n] * intra_w[a,j,k]
    onehot = (intra_idx[:, :, None] == np.arange(na_in)[None, None, :]).astype(np.float32)
    M = np.einsum("ajk,ajn->akn", intra_w, onehot)                       # [NAo, KS, NAi]

    # w_eff[a, c*NA_in + n, o] = sum_k W[o, c*KS + k] * M[a, k, n]   (exact fold)
    W3 = np.asarray(W).reshape(dim_out, dim_in, ks)
    w_eff = np.einsum("ock,akn->acno", W3, M).reshape(na_out, K, dim_out)

    # BatchNorm2d(eval): y = x*scale + shift ; fold scale into the weight columns.
    scale = np.asarray(gamma) / np.sqrt(np.asarray(running_var) + eps)
    shift = np.asarray(beta) - np.asarray(running_mean) * scale
    w_eff = w_eff * scale[None, None, :]

    # Lane-dense layout: output column = a*C_out + o ; zero-pad K and N to multiples of 128.
    Kpad = _round_up(K, 128)
    Npad = _round_up(n_out, 128)
    w2 = np.zeros((Kpad, Npad), np.float32)
    w2[:K, :n_out] = np.transpose(w_eff, (1, 0, 2)).reshape(K, n_out)
    shift2 = np.zeros((1, Npad), np.float32)
    shift2[0, :n_out] = np.tile(shift[None, :], (na_out, 1)).reshape(n_out)

    return dict(
        w2=jnp.asarray(w2, jnp.bfloat16),       # bf16 matmul operand (f32 MXU accumulation)
        shift2=jnp.asarray(shift2, jnp.float32),
        K=K, Kpad=Kpad, n_out=n_out, Npad=Npad,
        na_out=na_out, dim_out=dim_out)


# ----------------------------------------------------------------------------
# IntraZPConvBlock forward (jitted wrapper around the Pallas kernel)
# ----------------------------------------------------------------------------
@partial(jax.jit, static_argnames=("n_out", "na_out", "dim_out",
                                   "tile_m", "tile_n", "vmem_limit"))
def _fused_forward(feats, w2, shift2, *, n_out, na_out, dim_out,
                   tile_m, tile_n, vmem_limit):
    B, C_in, NP, NA_in = feats.shape
    K = C_in * NA_in
    Kpad, Npad = w2.shape

    # Cast to bf16 BEFORE the layout pass (halves transpose/pad HBM traffic); flatten the
    # batch axis into the point axis so the grid is a clean 2-D (M_tiles, N_tiles).
    x = jnp.transpose(feats.astype(jnp.bfloat16), (0, 2, 1, 3)).reshape(B * NP, K)
    M = B * NP
    M_pad = _round_up(M, tile_m)
    x2 = jnp.zeros((M_pad, Kpad), jnp.bfloat16).at[:M, :K].set(x)

    out = _pallas_matmul_bn_relu(x2, w2, shift2, tile_m, tile_n, vmem_limit)  # bf16 [M_pad, Npad]

    # [M_pad, Npad] -> [B, C_out, NP, NA_out]  (PyTorch layout, bf16 activations)
    y = out[:M, :n_out].reshape(B, NP, na_out, dim_out)
    return jnp.transpose(y, (0, 3, 1, 2))


def intra_zpconv_block_forward(x: SphericalPointCloud, fused, anchors_out):
    feats = x.feats                                            # [B, C_in, NP, NA_in]
    B, C_in, NP, NA_in = feats.shape
    assert fused["K"] == C_in * NA_in

    vmem_limit = _pick_vmem_limit()
    tile_m, tile_n = _choose_tiling(B * NP, fused["Kpad"], fused["Npad"], vmem_limit)

    feat = _fused_forward(feats, fused["w2"], fused["shift2"],
                          n_out=fused["n_out"], na_out=fused["na_out"],
                          dim_out=fused["dim_out"],
                          tile_m=tile_m, tile_n=tile_n, vmem_limit=vmem_limit)
    return SphericalPointCloud(x.xyz, feat, anchors_out)


# ----------------------------------------------------------------------------
# Pure-JAX reference (unfused, f32, mirrors the PyTorch op decomposition)
# ----------------------------------------------------------------------------
def reference_forward(feats, intra_idx, intra_w, W, gamma, beta, mean, var,
                      dim_in, dim_out, ks, eps=1e-5):
    gathered = feats[:, :, :, jnp.asarray(intra_idx)]                  # [B,C,P,NAo,ANN]
    grouped = jnp.einsum("bcpaj,ajk->bckpa", gathered, jnp.asarray(intra_w))
    y = jnp.einsum("ock,bckpa->bopa", W.reshape(dim_out, dim_in, ks), grouped)
    scale = gamma / jnp.sqrt(var + eps)
    y = y * scale[None, :, None, None] + (beta - mean * scale)[None, :, None, None]
    return jnp.maximum(y, 0.0)


# ----------------------------------------------------------------------------
if __name__ == "__main__":
    key = jax.random.PRNGKey(0)
    kf, kx, kp = jax.random.split(key, 3)

    # Small shapes consistent with the module
    B, DIM_IN, DIM_OUT = 2, 4, 8
    NP_PTS, NA_IN = 16, 12
    KERNEL_SIZE, ANCHOR_NN = 3, 4
    APERTURE, SIGMA = math.pi / 2.0, 0.3
    # anchor_out=None -> output anchors == input anchors
    anchors_in = fibonacci_sphere(NA_IN)
    anchors_out = anchors_in
    NA_OUT = anchors_out.shape[0]

    intra_idx, intra_w = build_intra_kernel(
        anchors_in, anchors_out, KERNEL_SIZE, APERTURE, SIGMA, ANCHOR_NN)

    W, gamma, beta, running_mean, running_var = init_params(kp, DIM_IN, DIM_OUT, KERNEL_SIZE)

    # One-time parameter fold (hoisted out of the forward path).
    fused = prepare_fused_params(intra_idx, intra_w, W, gamma, beta, running_mean,
                                 running_var, DIM_IN, DIM_OUT, KERNEL_SIZE, NA_IN)

    feats = jax.random.normal(kf, (B, DIM_IN, NP_PTS, NA_IN), jnp.float32)
    xyz = jax.random.normal(kx, (B, NP_PTS, 3), jnp.float32)
    x = SphericalPointCloud(xyz=xyz, feats=feats, anchors=jnp.asarray(anchors_in))

    out = intra_zpconv_block_forward(x, fused, jnp.asarray(anchors_out))
    jax.block_until_ready(out.feats)

    ref = reference_forward(feats, intra_idx, intra_w, W, gamma, beta,
                            running_mean, running_var, DIM_IN, DIM_OUT, KERNEL_SIZE)
    # Tolerances reflect bf16 matmul operands AND bf16 activation output (f32 MXU
    # accumulation + f32 BN-shift/ReLU epilogue, rounded to bf16 on store).
    np.testing.assert_allclose(np.asarray(out.feats.astype(jnp.float32)), np.asarray(ref),
                               rtol=2e-2, atol=1e-3)
    assert out.feats.shape == (B, DIM_OUT, NP_PTS, NA_OUT)
    assert out.xyz.shape == xyz.shape and out.anchors.shape == (NA_OUT, 3)
    print("KERNEL_OK")
</pallas_src>

<mosaic_0001>
module attributes {stable_mosaic.version = 11 : i64} {
  func.func @_fused_intra_zpconv_kernel(%arg0: i32, %arg1: i32, %arg2: memref<32x128xbf16, #tpu.memory_space<vmem>>, %arg3: memref<128x128xbf16, #tpu.memory_space<vmem>>, %arg4: memref<1x128xf32, #tpu.memory_space<vmem>>, %arg5: memref<32x128xbf16, #tpu.memory_space<vmem>>) attributes {dimension_semantics = [#tpu.dimension_semantics<parallel>, #tpu.dimension_semantics<parallel>], iteration_bounds = array<i64: 1, 1>, scalar_prefetch = 0 : i64, scratch_operands = 0 : i64, tpu.core_type = #tpu.core_type<tc>, window_params = [{transform_indices = @transform_0, window_bounds = array<i64: 32, 128>}, {pipeline_mode = #tpu.pipeline_mode<synchronous>, transform_indices = @transform_1, window_bounds = array<i64: 128, 128>}, {pipeline_mode = #tpu.pipeline_mode<synchronous>, transform_indices = @transform_2, window_bounds = array<i64: 1, 128>}, {transform_indices = @transform_3, window_bounds = array<i64: 32, 128>}]} {
    %c0 = arith.constant 0 : index
    %c0_0 = arith.constant 0 : index
    %0 = vector.load %arg2[%c0, %c0_0] : memref<32x128xbf16, #tpu.memory_space<vmem>>, vector<32x128xbf16>
    %c0_1 = arith.constant 0 : index
    %c0_2 = arith.constant 0 : index
    %1 = vector.load %arg3[%c0_1, %c0_2] : memref<128x128xbf16, #tpu.memory_space<vmem>>, vector<128x128xbf16>
    %cst = arith.constant dense<0.000000e+00> : vector<32x128xf32>
    %2 = tpu.matmul %0, %1, %cst {dimension_numbers = #tpu.dot_dimension_numbers<[1], [0], [0], [1], [0, 0, 1, 1], [], []>} : vector<32x128xbf16>, vector<128x128xbf16>, vector<32x128xf32> -> vector<32x128xf32>
    %c0_3 = arith.constant 0 : index
    %c0_4 = arith.constant 0 : index
    %3 = vector.load %arg4[%c0_3, %c0_4] : memref<1x128xf32, #tpu.memory_space<vmem>>, vector<1x128xf32>
    %4 = vector.broadcast %3 : vector<1x128xf32> to vector<32x128xf32>
    %5 = arith.addf %2, %4 : vector<32x128xf32>
    %cst_5 = arith.constant 0.000000e+00 : f32
    %6 = vector.broadcast %cst_5 : f32 to vector<32x128xf32>
    %7 = arith.maximumf %5, %6 : vector<32x128xf32>
    %8 = arith.truncf %7 : vector<32x128xf32> to vector<32x128xbf16>
    %c0_6 = arith.constant 0 : index
    %c0_7 = arith.constant 0 : index
    %9 = vector.load %arg5[%c0_6, %c0_7] : memref<32x128xbf16, #tpu.memory_space<vmem>>, vector<32x128xbf16>
    tpu.vector_store %arg5[%c0_6, %c0_7], %8 {strides = array<i32>} : memref<32x128xbf16, #tpu.memory_space<vmem>>, vector<32x128xbf16>,
    return
  }
  func.func @transform_0(%arg0: i32, %arg1: i32) -> (i32, i32) {
    %c0_i32 = arith.constant 0 : i32
    %c0_i32_0 = arith.constant 0 : i32
    return %arg0, %c0_i32 : i32, i32
  }
  func.func @transform_1(%arg0: i32, %arg1: i32) -> (i32, i32) {
    %c0_i32 = arith.constant 0 : i32
    %c0_i32_0 = arith.constant 0 : i32
    return %c0_i32, %arg1 : i32, i32
  }
  func.func @transform_2(%arg0: i32, %arg1: i32) -> (i32, i32) {
    %c0_i32 = arith.constant 0 : i32
    %c0_i32_0 = arith.constant 0 : i32
    return %c0_i32, %arg1 : i32, i32
  }
  func.func @transform_3(%arg0: i32, %arg1: i32) -> (i32, i32) {
    %c0_i32 = arith.constant 0 : i32
    return %arg0, %arg1 : i32, i32
  }
}

</mosaic_0001>

<llo_original>
// kernel: _fused_forward.1
$region0: #{_fused_forward.1}
  #allocation0 [shape = 'u32[]', space=smem, size = 0x4, offset = 0x4, fixed_abs, tag = 'smem constant byte address 0x4 - core index']
  #allocation1 [shape = 'u32[144,128]{1,0:T(1,128)}', space=vmem, size = 0x12000, scoped, tag = 'internal scratch']
  %s0 = inlined_call_operand.vmem [shape: bf16[32,128], index: 0, kind: input, shape index: {}]
  %s1 = inlined_call_operand.vmem [shape: bf16[128,128], index: 1, kind: input, shape index: {}]
  %s2 = inlined_call_operand.vmem [shape: f32[1,128], index: 2, kind: input, shape index: {}]
  %s3 = inlined_call_operand.vmem [shape: bf16[32,128], index: 3, kind: output, shape index: {}]
  %s4 = sld [smem:[#allocation0]]
  $region22: #{_fused_forward.1} parent=0
    _
  %s6 = ssub.s32 1, %s4
  %s7 = scalar_select 0, %s6, %s4
  // Predicated region
  $region2: #{_fused_forward.1} parent=0 // pred_check
    _
  $region3: #{_fused_forward.1} parent=0 // pred_check_branch
    %9 = sbr.rel (0) target = $region5
  $region4: #{_fused_forward.1} parent=0 // pred_region
    _
  $region5: #{_fused_forward.1} parent=0 // pred_fallthru
    _
  // Predicated region
  $region6: #{_fused_forward.1} parent=0 // pred_check
    _
  $region7: #{_fused_forward.1} parent=0 // pred_check_branch
    %11 = sbr.rel (0) target = $region9
  $region8: #{_fused_forward.1} parent=0 // pred_region
    _
  $region9: #{_fused_forward.1} parent=0 // pred_fallthru
    _
  // Predicated region
  $region10: #{_fused_forward.1} parent=0 // pred_check
    _
  $region11: #{_fused_forward.1} parent=0 // pred_check_branch
    %13 = sbr.rel (0) target = $region13
  $region12: #{_fused_forward.1} parent=0 // pred_region
    _
  $region13: #{_fused_forward.1} parent=0 // pred_fallthru
    _
  %v15 = vld [vmem:[%s0] sm:$0xf]
  %v16 = vld [vmem:[%s0 + $0x4] sm:$0xf]
  %v17 = vld [vmem:[%s0 + $0x8] sm:$0xf]
  %v18 = vld [vmem:[%s0 + $0xc] sm:$0xf]
  %v19 = vld [vmem:[%s1] sm:$0xf]
  %v20 = vld [vmem:[%s1 + $0x4] sm:$0xf]
  %v21 = vld [vmem:[%s1 + $0x8] sm:$0xf]
  %v22 = vld [vmem:[%s1 + $0xc] sm:$0xf]
  %v23 = vld [vmem:[%s1 + $0x10] sm:$0xf]
  %v24 = vld [vmem:[%s1 + $0x14] sm:$0xf]
  %v25 = vld [vmem:[%s1 + $0x18] sm:$0xf]
  %v26 = vld [vmem:[%s1 + $0x1c] sm:$0xf]
  %v27 = vld [vmem:[%s1 + $0x20] sm:$0xf]
  %v28 = vld [vmem:[%s1 + $0x24] sm:$0xf]
  %v29 = vld [vmem:[%s1 + $0x28] sm:$0xf]
  %v30 = vld [vmem:[%s1 + $0x2c] sm:$0xf]
  %v31 = vld [vmem:[%s1 + $0x30] sm:$0xf]
  %v32 = vld [vmem:[%s1 + $0x34] sm:$0xf]
  %v33 = vld [vmem:[%s1 + $0x38] sm:$0xf]
  %v34 = vld [vmem:[%s1 + $0x3c] sm:$0xf]
  %v35 = vld [vmem:[%s2] sm:$0x1]
  %v37 = vlaneseq
  %v38 = vshrl.u32 %v37, 7
  %v39 = vsub.s32 0, %v38
  %v40 = vrot.slane %v35, %v39
  %v46 = vunpack.c.l.b16 %v15
  %v47 = vunpack.c.l.b16 %v16
  %v48 = vunpack.c.l.b16 %v17
  %v49 = vunpack.c.l.b16 %v18
  %v50 = vpack.c.b16 %v47, %v46
  %v51 = vpack.c.b16 %v49, %v48
  %v70 = vunpack.c.l.b16 %v19
  %v71 = vunpack.c.l.b16 %v20
  %v72 = vunpack.c.l.b16 %v21
  %v73 = vunpack.c.l.b16 %v22
  %v74 = vunpack.c.l.b16 %v23
  %v75 = vunpack.c.l.b16 %v24
  %v76 = vunpack.c.l.b16 %v25
  %v77 = vunpack.c.l.b16 %v26
  %v78 = vunpack.c.l.b16 %v27
  %v79 = vunpack.c.l.b16 %v28
  %v80 = vunpack.c.l.b16 %v29
  %v81 = vunpack.c.l.b16 %v30
  %v82 = vunpack.c.l.b16 %v31
  %v83 = vunpack.c.l.b16 %v32
  %v84 = vunpack.c.l.b16 %v33
  %v85 = vunpack.c.l.b16 %v34
  %v86 = vpack.c.b16 %v71, %v70
  %v87 = vpack.c.b16 %v73, %v72
  %v88 = vpack.c.b16 %v75, %v74
  %v89 = vpack.c.b16 %v77, %v76
  %v90 = vpack.c.b16 %v79, %v78
  %v91 = vpack.c.b16 %v81, %v80
  %v92 = vpack.c.b16 %v83, %v82
  %v93 = vpack.c.b16 %v85, %v84
  %102 = vmatprep.subr.bf16.mxu0 0
  %103 = vmatpush1.bf16.msra.mxu0 %v93
  %104 = vmatprep.subr.bf16.mxu0 0
  %105 = vmatpush1.bf16.msra.mxu0 %v92
  %106 = vmatprep.subr.bf16.mxu0 0
  %107 = vmatpush1.bf16.msra.mxu0 %v91
  %108 = vmatprep.subr.bf16.mxu0 0
  %109 = vmatpush1.bf16.msra.mxu0 %v90
  %110 = vmatprep.subr.bf16.mxu0 0
  %111 = vmatpush1.bf16.msra.mxu0 %v89
  %112 = vmatprep.subr.bf16.mxu0 0
  %113 = vmatpush1.bf16.msra.mxu0 %v88
  %114 = vmatprep.subr.bf16.mxu0 0
  %115 = vmatpush1.bf16.msra.mxu0 %v87
  %116 = vmatprep.subr.bf16.mxu0 0
  %117 = vmatpush1.bf16.msra.mxu0 %v86
  %118 = vmatprep.subr.bf16.mxu0 0
  %119 = vmatpush2.bf16.msra.mxu0 0
  %120 = vmatprep.subr.bf16.mxu0 0
  %121 = vmatpush2.bf16.msra.mxu0 0
  %122 = vmatprep.subr.bf16.mxu0 0
  %123 = vmatpush2.bf16.msra.mxu0 0
  %124 = vmatprep.subr.bf16.mxu0 0
  %125 = vmatpush2.bf16.msra.mxu0 0
  %126 = vmatprep.subr.bf16.mxu0 0
  %127 = vmatpush2.bf16.msra.mxu0 0
  %128 = vmatprep.subr.bf16.mxu0 0
  %129 = vmatpush2.bf16.msra.mxu0 0
  %130 = vmatprep.subr.bf16.mxu0 0
  %131 = vmatpush2.bf16.msra.mxu0 0
  %132 = vmatprep.subr.bf16.mxu0 0
  %133 = vmatpush2.bf16.msra.mxu0 0
  %134 = vmatprep.mubr.bf16.mxu0 0
  %135 = vmatmul.mubr.bf16.gmra.mxu0 %v50
  %v136 = vpop.f32.mrf.mxu0
  %v137 = vadd.f32 %v40, %v136
  %v138 = vpop.f32.mrf.mxu0
  %v139 = vpop.f32.mrf.mxu0
  %v140 = vadd.f32 %v40, %v139
  %v141 = vpop.f32.mrf.mxu0
  %142 = vmatprep.mubr.bf16.mxu0 0
  %143 = vmatmul.mubr.bf16.gmra.mxu0 %v51
  %v144 = vpop.f32.mrf.mxu0
  %v145 = vadd.f32 %v40, %v144
  %v146 = vpop.f32.mrf.mxu0
  %v147 = vpop.f32.mrf.mxu0
  %v148 = vadd.f32 %v40, %v147
  %v149 = vpop.f32.mrf.mxu0
  %150 = vdwg.mxu0
  %v151 = vmax.f32 %v137, 0.0
  %v152 = vmax.f32 %v140, 0.0
  %v153 = vmax.f32 %v145, 0.0
  %v154 = vmax.f32 %v148, 0.0
  %v155 = vpack.c.bf16 %v152, %v151
  %v156 = vpack.c.bf16 %v154, %v153
  %v159 = vunpack.c.l.b16 %v155
  %v160 = vunpack.c.h.b16 %v155
  %v161 = vunpack.c.l.b16 %v156
  %v162 = vunpack.c.h.b16 %v156
  %v163 = vpack.c.b16 %v159, %v159
  %v164 = vpack.c.b16 %v160, %v160
  %v165 = vpack.c.b16 %v161, %v161
  %v166 = vpack.c.b16 %v162, %v162
  %171 = vst [vmem:[%s3] sm:$0xf] %v163
  %172 = vst [vmem:[%s3 + $0x4] sm:$0xf] %v164
  %173 = vst [vmem:[%s3 + $0x8] sm:$0xf] %v165
  %174 = vst [vmem:[%s3 + $0xc] sm:$0xf] %v166
  // Predicated region
  $region14: #{_fused_forward.1} parent=0 // pred_check
    _
  $region15: #{_fused_forward.1} parent=0 // pred_check_branch
    %176 = sbr.rel (0) target = $region17
  $region16: #{_fused_forward.1} parent=0 // pred_region
    _
  $region17: #{_fused_forward.1} parent=0 // pred_fallthru
    _
  // Predicated region
  $region18: #{_fused_forward.1} parent=0 // pred_check
    _
  $region19: #{_fused_forward.1} parent=0 // pred_check_branch
    %178 = sbr.rel (0) target = $region21
  $region20: #{_fused_forward.1} parent=0 // pred_region
    _
  $region21: #{_fused_forward.1} parent=0 // pred_fallthru
    _

</llo_original>
